<compile_context>
chip_gen: v7x
topology: tpu7x:2x2x1
jax: 0.10.0
libtpu: 0.0.40
codegen_flags: <defaults>
</compile_context>

<pallas_src>
import jax
import jax.numpy as jnp
from jax.experimental import pallas as pl
from jax.experimental.pallas import tpu as pltpu


def _attn_kernel(h_ref, enc_ref, mask_ref, out_ref, scores_ref):
    """One grid step = one source position `s` for one batch tile.

    h_ref      : (B_t, H)   decoder hidden state        (resident across s)
    enc_ref    : (B_t, H)   encoder outputs at source s (new DMA each step)
    mask_ref   : (B_t, S)   attention mask              (resident across s)
    out_ref    : (B_t, S)   attention weights           (resident across s)
    scores_ref : (S, B_t)   VMEM scratch accumulating raw scores
    """
    s = pl.program_id(1)
    n_s = pl.num_programs(1)

    # Upcast once per tile (no bf16 intermediates in the exp/sum path).
    h = h_ref[...].astype(jnp.float32)        # (B_t, H)
    enc_s = enc_ref[...].astype(jnp.float32)  # (B_t, H)

    # dot_score for this source position: reduce over the hidden (lane) dim.
    col = jnp.sum(h * enc_s, axis=-1, keepdims=True)     # (B_t, 1)
    # Row `s` of the (S, B_t) scratch: dynamic offset on the sublane axis only,
    # the lane axis stays static/full.
    scores_ref[pl.ds(s, 1), :] = jnp.transpose(col)       # (1, B_t)

    # After the last source position: mask + softmax over S (lane-dense).
    @pl.when(s == n_s - 1)
    def _():
        scores = jnp.transpose(scores_ref[...])            # (B_t, S)
        mask = mask_ref[...]                               # (B_t, S) int32
        scores = jnp.where(mask == 0, jnp.float32(-100000.0), scores)

        m = jnp.max(scores, axis=-1, keepdims=True)
        e = jnp.exp(scores - m)
        denom = jnp.sum(e, axis=-1, keepdims=True)
        inv = pl.reciprocal(denom, approx=True)            # EUP
        inv = inv * (2.0 - denom * inv)                    # 1 Newton step -> ~f32 exact
        out_ref[...] = (e * inv).astype(out_ref.dtype)


def attention_forward(hidden, encoder_outputs, mask, *, b_tile=None):
    """Luong dot attention, matching the PyTorch module.

    hidden          : (1, B, H)
    encoder_outputs : (S, B, H)
    mask            : (B, S)   (0 => masked)
    returns         : (B, 1, S) float32 attention weights
    """
    S, B, H = encoder_outputs.shape
    assert hidden.shape == (1, B, H), hidden.shape
    assert mask.shape == (B, S), mask.shape

    mask_i = mask.astype(jnp.int32)

    if b_tile is None:
        if B <= 8:
            b_tile = B                       # full dim -> satisfies (8,128) rule
        else:
            # Keep a (b_tile, H) f32 slab around ~2 MiB; multiple of 8 sublanes.
            rows = max(8, (2 * 1024 * 1024) // (4 * H))
            b_tile = min(B, rows)
            b_tile -= b_tile % 8

    grid = (pl.cdiv(B, b_tile), S)           # B outer (parallel), S inner (reduction)

    out = pl.pallas_call(
        _attn_kernel,
        out_shape=jax.ShapeDtypeStruct((B, S), jnp.float32),
        grid_spec=pltpu.PrefetchScalarGridSpec(
            num_scalar_prefetch=0,
            grid=grid,
            in_specs=[
                # hidden (1, B, H): squeeze the leading singleton, tile over B.
                pl.BlockSpec((pl.Squeezed(), b_tile, H), lambda b, s: (0, b, 0)),
                # encoder_outputs (S, B, H): one source position per grid step.
                # The (S,B,H)->batch-major layout change is done by the index_map,
                # so there is no extra HBM transpose of the largest tensor.
                pl.BlockSpec((pl.Squeezed(), b_tile, H), lambda b, s: (s, b, 0)),
                # mask (B, S): constant block index across s -> loaded once / B tile.
                pl.BlockSpec((b_tile, S), lambda b, s: (b, 0)),
            ],
            out_specs=pl.BlockSpec((b_tile, S), lambda b, s: (b, 0)),
            scratch_shapes=[pltpu.VMEM((S, b_tile), jnp.float32)],
        ),
        compiler_params=pltpu.CompilerParams(
            dimension_semantics=("parallel", "arbitrary"),
            vmem_limit_bytes=32 * 1024 * 1024,
        ),
    )(hidden, encoder_outputs, mask_i)

    return out[:, None, :]                   # (B, 1, S)


def _reference(hidden, encoder_outputs, mask):
    scores = jnp.sum(hidden * encoder_outputs, axis=2)     # (S, B)
    scores = scores.T                                      # (B, S)
    scores = jnp.where(mask == 0, -100000.0, scores)
    return jax.nn.softmax(scores, axis=1)[:, None, :]


if __name__ == "__main__":
    B, S, H = 2, 8, 32  # batch, seq, hidden_size

    key = jax.random.PRNGKey(0)
    k1, k2 = jax.random.split(key)
    hidden = jax.random.normal(k1, (1, B, H), dtype=jnp.float32)
    encoder_outputs = jax.random.normal(k2, (S, B, H), dtype=jnp.float32)

    # mask: batch 0 attends to all 8 positions, batch 1 only to the first 5.
    lengths = jnp.array([8, 5], dtype=jnp.int32)
    mask = (jnp.arange(S)[None, :] < lengths[:, None]).astype(jnp.int32)  # (B, S)

    out = attention_forward(hidden, encoder_outputs, mask)
    out = jax.block_until_ready(out)

    ref = _reference(hidden, encoder_outputs, mask)
    assert out.shape == (B, 1, S), out.shape
    assert jnp.allclose(out, ref, atol=2e-5, rtol=2e-5), "mismatch vs reference"

    print("KERNEL_OK")
</pallas_src>

<mosaic_0001>
module attributes {stable_mosaic.version = 11 : i64} {
  func.func @_attn_kernel(%arg0: i32, %arg1: i32, %arg2: memref<1x2x32xf32, #tpu.memory_space<vmem>>, %arg3: memref<1x2x32xf32, #tpu.memory_space<vmem>>, %arg4: memref<2x8xi32, #tpu.memory_space<vmem>>, %arg5: memref<2x8xf32, #tpu.memory_space<vmem>>, %arg6: memref<8x2xf32, #tpu.memory_space<vmem>>) attributes {dimension_semantics = [#tpu.dimension_semantics<parallel>, #tpu.dimension_semantics<arbitrary>], iteration_bounds = array<i64: 1, 8>, scalar_prefetch = 0 : i64, scratch_operands = 1 : i64, tpu.core_type = #tpu.core_type<tc>, window_params = [{transform_indices = @transform_0, window_bounds = array<i64: 1, 2, 32>}, {transform_indices = @transform_1, window_bounds = array<i64: 1, 2, 32>}, {transform_indices = @transform_2, window_bounds = array<i64: 2, 8>}, {transform_indices = @transform_3, window_bounds = array<i64: 2, 8>}]} {
    %c0 = arith.constant 0 : index
    %c0_0 = arith.constant 0 : index
    %c0_1 = arith.constant 0 : index
    %0 = vector.load %arg2[%c0, %c0_0, %c0_1] : memref<1x2x32xf32, #tpu.memory_space<vmem>>, vector<1x2x32xf32>
    %1 = vector.shape_cast %0 : vector<1x2x32xf32> to vector<2x32xf32>
    %c0_2 = arith.constant 0 : index
    %c0_3 = arith.constant 0 : index
    %c0_4 = arith.constant 0 : index
    %2 = vector.load %arg3[%c0_2, %c0_3, %c0_4] : memref<1x2x32xf32, #tpu.memory_space<vmem>>, vector<1x2x32xf32>
    %3 = vector.shape_cast %2 : vector<1x2x32xf32> to vector<2x32xf32>
    %4 = arith.mulf %1, %3 : vector<2x32xf32>
    %cst = arith.constant dense<0.000000e+00> : vector<2xf32>
    %5 = vector.multi_reduction <add>, %4, %cst [1] : vector<2x32xf32> to vector<2xf32>
    %6 = vector.shape_cast %5 : vector<2xf32> to vector<2x1xf32>
    %7 = tpu.transpose %6, [1, 0] : vector<2x1xf32> -> vector<1x2xf32>
    %8 = arith.index_cast %arg1 : i32 to index
    %c0_5 = arith.constant 0 : index
    %9 = vector.load %arg6[%8, %c0_5] : memref<8x2xf32, #tpu.memory_space<vmem>>, vector<1x2xf32>
    tpu.vector_store %arg6[%8, %c0_5], %7 {strides = array<i32>} : memref<8x2xf32, #tpu.memory_space<vmem>>, vector<1x2xf32>,
    %c7_i32 = arith.constant 7 : i32
    %10 = arith.cmpi eq, %arg1, %c7_i32 : i32
    %11 = arith.extui %10 : i1 to i32
    %c0_i32 = arith.constant 0 : i32
    %12 = arith.cmpi ne, %11, %c0_i32 : i32
    scf.if %12 {
      %c0_6 = arith.constant 0 : index
      %c0_7 = arith.constant 0 : index
      %13 = vector.load %arg6[%c0_6, %c0_7] : memref<8x2xf32, #tpu.memory_space<vmem>>, vector<8x2xf32>
      %14 = tpu.transpose %13, [1, 0] : vector<8x2xf32> -> vector<2x8xf32>
      %c0_8 = arith.constant 0 : index
      %c0_9 = arith.constant 0 : index
      %15 = vector.load %arg4[%c0_8, %c0_9] : memref<2x8xi32, #tpu.memory_space<vmem>>, vector<2x8xi32>
      %c0_i32_10 = arith.constant 0 : i32
      %16 = vector.broadcast %c0_i32_10 : i32 to vector<2x8xi32>
      %17 = arith.cmpi eq, %15, %16 : vector<2x8xi32>
      %cst_11 = arith.constant -1.000000e+05 : f32
      %18 = vector.broadcast %cst_11 : f32 to vector<2x8xf32>
      %19 = arith.select %17, %18, %14 : vector<2x8xi1>, vector<2x8xf32>
      %cst_12 = arith.constant dense<0xFF800000> : vector<2xf32>
      %20 = vector.multi_reduction <maximumf>, %19, %cst_12 [1] : vector<2x8xf32> to vector<2xf32>
      %21 = vector.shape_cast %20 : vector<2xf32> to vector<2x1xf32>
      %22 = vector.broadcast %21 : vector<2x1xf32> to vector<2x8xf32>
      %23 = arith.subf %19, %22 : vector<2x8xf32>
      %24 = math.exp %23 : vector<2x8xf32>
      %cst_13 = arith.constant dense<0.000000e+00> : vector<2xf32>
      %25 = vector.multi_reduction <add>, %24, %cst_13 [1] : vector<2x8xf32> to vector<2xf32>
      %26 = vector.shape_cast %25 : vector<2xf32> to vector<2x1xf32>
      %27 = tpu.reciprocal %26 {approx = true} : vector<2x1xf32> -> vector<2x1xf32>
      %28 = arith.mulf %26, %27 : vector<2x1xf32>
      %cst_14 = arith.constant 2.000000e+00 : f32
      %29 = vector.broadcast %cst_14 : f32 to vector<2x1xf32>
      %30 = arith.subf %29, %28 : vector<2x1xf32>
      %31 = arith.mulf %27, %30 : vector<2x1xf32>
      %32 = vector.broadcast %31 : vector<2x1xf32> to vector<2x8xf32>
      %33 = arith.mulf %24, %32 : vector<2x8xf32>
      %c0_15 = arith.constant 0 : index
      %c0_16 = arith.constant 0 : index
      %34 = vector.load %arg5[%c0_15, %c0_16] : memref<2x8xf32, #tpu.memory_space<vmem>>, vector<2x8xf32>
      tpu.vector_store %arg5[%c0_15, %c0_16], %33 {strides = array<i32>} : memref<2x8xf32, #tpu.memory_space<vmem>>, vector<2x8xf32>,
    } else {
    }
    return
  }
  func.func @transform_0(%arg0: i32, %arg1: i32) -> (i32, i32, i32) {
    %c0_i32 = arith.constant 0 : i32
    %c0_i32_0 = arith.constant 0 : i32
    %c0_i32_1 = arith.constant 0 : i32
    return %c0_i32, %arg0, %c0_i32_0 : i32, i32, i32
  }
  func.func @transform_1(%arg0: i32, %arg1: i32) -> (i32, i32, i32) {
    %c0_i32 = arith.constant 0 : i32
    %c0_i32_0 = arith.constant 0 : i32
    return %arg1, %arg0, %c0_i32 : i32, i32, i32
  }
  func.func @transform_2(%arg0: i32, %arg1: i32) -> (i32, i32) {
    %c0_i32 = arith.constant 0 : i32
    %c0_i32_0 = arith.constant 0 : i32
    return %arg0, %c0_i32 : i32, i32
  }
  func.func @transform_3(%arg0: i32, %arg1: i32) -> (i32, i32) {
    %c0_i32 = arith.constant 0 : i32
    %c0_i32_0 = arith.constant 0 : i32
    return %arg0, %c0_i32 : i32, i32
  }
}

</mosaic_0001>

<llo_original>
// kernel: tpu_custom_call.1
$region0: #{tpu_custom_call.1}
  #allocation0 [shape = 'u32[]', space=smem, size = 0x4, offset = 0x4, fixed_abs, tag = 'smem constant byte address 0x4 - core index']
  #allocation1 [shape = 'u32[144,128]{1,0:T(1,128)}', space=vmem, size = 0x12000, scoped, tag = 'internal scratch']
  #allocation2 [shape = 'f32[8,2]{1,0:T(8,128)}', space=vmem, size = 0x1000, scoped, tag = 'scratch operand']
  %s0 = inlined_call_operand.hbm [shape: f32[1,2,32], index: 0, kind: input, shape index: {}]
  %s1 = inlined_call_operand.hbm [shape: f32[8,2,32], index: 1, kind: input, shape index: {}]
  %s2 = inlined_call_operand.vmem [shape: s32[2,8], index: 2, kind: input, shape index: {}]
  %s3 = inlined_call_operand.hbm [shape: f32[2,8], index: 3, kind: output, shape index: {}]
  %s4 = sld [smem:[#allocation0]]
  $region57: #{tpu_custom_call.1} parent=0
    _
  %s6 = ssub.s32 1, %s4
  %s7 = scalar_select 0, %s6, %s4
  $region1: #{tpu_custom_call.1} parent=0
    #allocation3 [shape = 'u8[1024]{0}', space=vmem, size = 0x400, scoped, tag = 'input window, operand 0, single buffered']
    #allocation4 [shape = 's32[2]{0}', space=sflag, size = 0x8, scoped, tag = 'scoped memory for tpu_custom_call.1']
    #allocation5 [shape = 's32[2]{0}', space=sflag, size = 0x8, scoped, tag = 'scoped memory for tpu_custom_call.1']
    #allocation6 [shape = 'u8[2048]{0}', space=vmem, size = 0x800, scoped, tag = 'input window, operand 1']
    #allocation7 [shape = 's32[2]{0}', space=sflag, size = 0x8, scoped, tag = 'scoped memory for tpu_custom_call.1']
    #allocation8 [shape = 'u8[1024]{0}', space=vmem, size = 0x400, scoped, tag = 'output window, operand 0, single buffered']
    %8 = vsyncpa [#allocation4], 0
    %9 = vsyncpa [#allocation7], 0
    %s10 = scalar_lea.sflag [#allocation7], 1
    %11 = vsyncpa %s10, 0
    %12 = vsyncpa [#allocation5], 0
    loop: start=0, step=1, limit=10
    $region2: #{tpu_custom_call.1} parent=1 // loop_pre_header
      _
    $region3: #{tpu_custom_call.1} parent=1 // loop_header
      %s14 = sphi 0, %s18
      %p15 = scmp.ge.s32.totalorder %s14, 10
      %s21 = sphi 0, %s33
      %s22 = sphi 0, %s29
      %s23 = sphi 0, %s21
      %s24 = sphi 0, %s22
      %s25 = sphi 0, %s23
      %s26 = sphi 0, %s24
      %s36 = sphi 0, %s38
      %s39 = sphi 0, %s36
      %s40 = sphi 0, %s39
      %s56 = sphi 0, %s40
      %s64 = sphi 0, %s66
      %s67 = sphi 0, %s64
      %s68 = sphi 0, %s67
      %s84 = sphi 0, %s68
      %s90 = sphi 0, %s92
      %s93 = sphi 0, %s90
      %s94 = sphi 0, %s93
      %s110 = sphi 0, %s94
      %s116 = sphi 0, %s118
      %s119 = sphi 0, %s116
      %s120 = sphi 0, %s119
      %s136 = sphi 0, %s120
    $region4: #{tpu_custom_call.1} parent=1 // loop_header_branch
      %17 = sbr.rel (%p15) target = $region8
    $region5: #{tpu_custom_call.1} parent=1 // loop_body
      %s19 = ssub.s32 %s14, 1
      %s20 = ssub.s32 %s14, 2
      %s27 = sadd.s32 1, %s22
      %p28 = scmp.ge.s32.totalorder %s27, 8
      %s29 = scalar_select %p28, 0, %s27
      %s30 = sadd.s32 1, %s21
      %s31 = scalar_select %p28, %s30, %s21
      %p32 = scmp.ge.s32.totalorder %s31, 1
      %s33 = scalar_select %p32, 0, %s31
      %s34 = ssub.s32 %s21, %s33
      %p35 = scmp.eq.s32.totalorder %s34, 0
      %s37 = sadd.s32 %s36, 1
      %s38 = scalar_select %p35, %s36, %s37
      %p41 = pneg %p35
      %p42 = scmp.eq.s32.totalorder %s14, 7
      %p43 = por %p41, %p42
      %p44 = scmp.ne.s32.totalorder %s36, %s39
      %p45 = scmp.eq.s32.totalorder %s14, 0
      %p46 = por %p44, %p45
      %p47 = scmp.ne.s32.totalorder %s36, %s39
      %p48 = scmp.eq.s32.totalorder %s19, 7
      %p49 = por %p47, %p48
      %p50 = scmp.ne.s32.totalorder %s39, %s40
      %p51 = scmp.eq.s32.totalorder %s19, 0
      %p52 = por %p50, %p51
      %p53 = scmp.ne.s32.totalorder %s39, %s40
      %p54 = scmp.eq.s32.totalorder %s20, 7
      %p55 = por %p53, %p54
      %p57 = scmp.ne.s32.totalorder %s40, %s56
      %p58 = scmp.eq.s32.totalorder %s20, 0
      %p59 = por %p57, %p58
      %s60 = ssub.s32 %s22, %s29
      %s61 = ssub.s32 %s21, %s33
      %s62 = sor.u32 %s60, %s61
      %p63 = scmp.eq.s32.totalorder %s62, 0
      %s65 = sadd.s32 %s64, 1
      %s66 = scalar_select %p63, %s64, %s65
      %p69 = pneg %p63
      %p70 = scmp.eq.s32.totalorder %s14, 7
      %p71 = por %p69, %p70
      %p72 = scmp.ne.s32.totalorder %s64, %s67
      %p73 = scmp.eq.s32.totalorder %s14, 0
      %p74 = por %p72, %p73
      %p75 = scmp.ne.s32.totalorder %s64, %s67
      %p76 = scmp.eq.s32.totalorder %s19, 7
      %p77 = por %p75, %p76
      %p78 = scmp.ne.s32.totalorder %s67, %s68
      %p79 = scmp.eq.s32.totalorder %s19, 0
      %p80 = por %p78, %p79
      %p81 = scmp.ne.s32.totalorder %s67, %s68
      %p82 = scmp.eq.s32.totalorder %s20, 7
      %p83 = por %p81, %p82
      %p85 = scmp.ne.s32.totalorder %s68, %s84
      %p86 = scmp.eq.s32.totalorder %s20, 0
      %p87 = por %p85, %p86
      %s88 = ssub.s32 %s21, %s33
      %p89 = scmp.eq.s32.totalorder %s88, 0
      %s91 = sadd.s32 %s90, 1
      %s92 = scalar_select %p89, %s90, %s91
      %p95 = pneg %p89
      %p96 = scmp.eq.s32.totalorder %s14, 7
      %p97 = por %p95, %p96
      %p98 = scmp.ne.s32.totalorder %s90, %s93
      %p99 = scmp.eq.s32.totalorder %s14, 0
      %p100 = por %p98, %p99
      %p101 = scmp.ne.s32.totalorder %s90, %s93
      %p102 = scmp.eq.s32.totalorder %s19, 7
      %p103 = por %p101, %p102
      %p104 = scmp.ne.s32.totalorder %s93, %s94
      %p105 = scmp.eq.s32.totalorder %s19, 0
      %p106 = por %p104, %p105
      %p107 = scmp.ne.s32.totalorder %s93, %s94
      %p108 = scmp.eq.s32.totalorder %s20, 7
      %p109 = por %p107, %p108
      %p111 = scmp.ne.s32.totalorder %s94, %s110
      %p112 = scmp.eq.s32.totalorder %s20, 0
      %p113 = por %p111, %p112
      %s114 = ssub.s32 %s21, %s33
      %p115 = scmp.eq.s32.totalorder %s114, 0
      %s117 = sadd.s32 %s116, 1
      %s118 = scalar_select %p115, %s116, %s117
      %p121 = pneg %p115
      %p122 = scmp.eq.s32.totalorder %s14, 7
      %p123 = por %p121, %p122
      %p124 = scmp.ne.s32.totalorder %s116, %s119
      %p125 = scmp.eq.s32.totalorder %s14, 0
      %p126 = por %p124, %p125
      %p127 = scmp.ne.s32.totalorder %s116, %s119
      %p128 = scmp.eq.s32.totalorder %s19, 7
      %p129 = por %p127, %p128
      %p130 = scmp.ne.s32.totalorder %s119, %s120
      %p131 = scmp.eq.s32.totalorder %s19, 0
      %p132 = por %p130, %p131
      %p133 = scmp.ne.s32.totalorder %s119, %s120
      %p134 = scmp.eq.s32.totalorder %s20, 7
      %p135 = por %p133, %p134
      %p137 = scmp.ne.s32.totalorder %s120, %s136
      %p138 = scmp.eq.s32.totalorder %s20, 0
      %p139 = por %p137, %p138
      %p140 = scmp.le.s32.totalorder 1, %s14
      %p141 = scmp.lt.s32.totalorder %s14, 9
      %p142 = pnand %p140, %p141
      %p143 = pneg %p142
      // Predicated region
      $region9: #{tpu_custom_call.1} parent=5 // pred_check
        _
      $region10: #{tpu_custom_call.1} parent=5 // pred_check_branch
        %145 = sbr.rel (%p142) target = $region12
      $region11: #{tpu_custom_call.1} parent=5 // pred_region
        %s146 = ssub.s32 %s14, 1
        // Predicated region
        $region13: #{tpu_custom_call.1} parent=11 // pred_check
          %p147 = pneg %p52
        $region14: #{tpu_custom_call.1} parent=11 // pred_check_branch
          %149 = sbr.rel (%p147) target = $region16
        $region15: #{tpu_custom_call.1} parent=11 // pred_region
          %s151 = ssub.s32 32, 32
          %152 = vsyncadd [#allocation4], %s151
          %s153 = smul.addr %s23, 32
          %s154 = scalar_lea.hbm %s0, %s153
          %s156 = sshll.u32 [#allocation3], 4
          %s157 = int_to_ptr.vmem [resolvable:$true] %s156
          %159 = dma.hbm_to_vmem [thread:$0]  %s154, 32, %s157, [#allocation4]
        $region16: #{tpu_custom_call.1} parent=11 // pred_fallthru
          _
        // Predicated region
        $region17: #{tpu_custom_call.1} parent=11 // pred_check
          %p160 = pneg %p106
        $region18: #{tpu_custom_call.1} parent=11 // pred_check_branch
          %162 = sbr.rel (%p160) target = $region20
        $region19: #{tpu_custom_call.1} parent=11 // pred_region
          %p163 = scmp.lt.s32.totalorder %s23, 0
          %s164 = scalar_select %p163, %s23, 0
          %s165 = smul.addr %s164, 2
          %s166 = scalar_lea.vmem %s2, %s165
        $region20: #{tpu_custom_call.1} parent=11 // pred_fallthru
          _
      $region12: #{tpu_custom_call.1} parent=5 // pred_fallthru
        _
      %p167 = scmp.lt.s32.totalorder %s14, 8
      // Predicated region
      $region21: #{tpu_custom_call.1} parent=5 // pred_check
        %p168 = pneg %p167
      $region22: #{tpu_custom_call.1} parent=5 // pred_check_branch
        %170 = sbr.rel (%p168) target = $region24
      $region23: #{tpu_custom_call.1} parent=5 // pred_region
        // Predicated region
        $region25: #{tpu_custom_call.1} parent=23 // pred_check
          %p171 = pneg %p74
        $region26: #{tpu_custom_call.1} parent=23 // pred_check_branch
          %173 = sbr.rel (%p171) target = $region28
        $region27: #{tpu_custom_call.1} parent=23 // pred_region
          %s174 = sand.u32 %s64, 1
          %s175 = scalar_lea.sflag [#allocation7], %s174
          %s176 = sand.u32 %s64, 1
          %s177 = smul.addr %s176, 2
          %s178 = scalar_lea.vmem [#allocation6], %s177
          %s180 = ssub.s32 32, 32
          %181 = vsyncadd %s175, %s180
          %s182 = sadd.s32 %s21, %s22
          %s183 = smul.addr %s182, 32
          %s184 = scalar_lea.hbm %s1, %s183
          %s186 = sshll.u32 %s178, 4
          %s187 = int_to_ptr.vmem [resolvable:$true] %s186
          %189 = dma.hbm_to_vmem [thread:$0]  %s184, 32, %s187, %s175
        $region28: #{tpu_custom_call.1} parent=23 // pred_fallthru
          _
      $region24: #{tpu_custom_call.1} parent=5 // pred_fallthru
        _
      %p190 = scmp.le.s32.totalorder 1, %s14
      %p191 = scmp.lt.s32.totalorder %s14, 9
      %p192 = pnand %p190, %p191
      %p193 = pneg %p192
      // Predicated region
      $region29: #{tpu_custom_call.1} parent=5 // pred_check
        _
      $region30: #{tpu_custom_call.1} parent=5 // pred_check_branch
        %195 = sbr.rel (%p192) target = $region32
      $region31: #{tpu_custom_call.1} parent=5 // pred_region
        %s196 = ssub.s32 %s14, 1
        // Predicated region
        $region33: #{tpu_custom_call.1} parent=31 // pred_check
          %p197 = pneg %p52
        $region34: #{tpu_custom_call.1} parent=31 // pred_check_branch
          %199 = sbr.rel (%p197) target = $region36
        $region35: #{tpu_custom_call.1} parent=31 // pred_region
          %200 = dma.done [#allocation4], 32
        $region36: #{tpu_custom_call.1} parent=31 // pred_fallthru
          _
        %s201 = sand.u32 %s67, 1
        %s202 = scalar_lea.sflag [#allocation7], %s201
        %s203 = sand.u32 %s67, 1
        %s204 = smul.addr %s203, 2
        %s205 = scalar_lea.vmem [#allocation6], %s204
        // Predicated region
        $region37: #{tpu_custom_call.1} parent=31 // pred_check
          %p206 = pneg %p80
        $region38: #{tpu_custom_call.1} parent=31 // pred_check_branch
          %208 = sbr.rel (%p206) target = $region40
        $region39: #{tpu_custom_call.1} parent=31 // pred_region
          %209 = dma.done %s202, 32
        $region40: #{tpu_custom_call.1} parent=31 // pred_fallthru
          _
        %p210 = pneg %p52
        %p211 = pneg %p49
        %s212 = sand.u32 %s67, 1
        %s213 = scalar_lea.sflag [#allocation7], %s212
        %s214 = sand.u32 %s67, 1
        %s215 = smul.addr %s214, 2
        %s216 = scalar_lea.vmem [#allocation6], %s215
        %p217 = pneg %p80
        %p218 = pneg %p77
        %p219 = scmp.lt.s32.totalorder %s23, 0
        %s220 = scalar_select %p219, %s23, 0
        %s221 = smul.addr %s220, 2
        %s222 = scalar_lea.vmem %s2, %s221
        %p223 = pneg %p106
        %p224 = pneg %p103
        %p225 = pneg %p132
        %p226 = pneg %p129
        %p227 = scmp.lt.s32.totalorder %s23, 0
        %s228 = scalar_select %p227, %s23, 0
        %s229 = smul.addr %s228, 2
        %s230 = scalar_lea.vmem %s2, %s229
        %v231 = vld [vmem:[#allocation3] sm:$0x3]
        %v232 = vld [vmem:[%s205] sm:$0x3]
        %v233 = vmul.f32 %v231, %v232
        %vm234 = vcmask 254976
        %v235 = vsel %vm234, %v233, 0.0
        %236 = vadd.xlane.f32.xlu0 %v235
        %v237 = vpop.xlane.xlu0 %236
        %238 = vxpose.xlu0.b32.start [1/16] %v237, 128
        %239 = vxpose.xlu0.b32.cont [2/16] 0.0, 128
        %240 = vxpose.xlu0.b32.cont [3/16] 0.0, 128
        %241 = vxpose.xlu0.b32.cont [4/16] 0.0, 128
        %242 = vxpose.xlu0.b32.cont [5/16] 0.0, 128
        %243 = vxpose.xlu0.b32.cont [6/16] 0.0, 128
        %244 = vxpose.xlu0.b32.cont [7/16] 0.0, 128
        %245 = vxpose.xlu0.b32.cont [8/16] 0.0, 128
        %246 = vxpose.xlu0.b32.cont [9/16] 0.0, 128
        %247 = vxpose.xlu0.b32.cont [10/16] 0.0, 128
        %248 = vxpose.xlu0.b32.cont [11/16] 0.0, 128
        %249 = vxpose.xlu0.b32.cont [12/16] 0.0, 128
        %250 = vxpose.xlu0.b32.cont [13/16] 0.0, 128
        %251 = vxpose.xlu0.b32.cont [14/16] 0.0, 128
        %252 = vxpose.xlu0.b32.cont [15/16] 0.0, 128
        %253 = vxpose.xlu0.b32.end [16/16] 0.0, 128
        %v254 = vpop.trf.xlu0
        %v255 = vpop.trf.xlu0
        %v256 = vpop.trf.xlu0
        %v257 = vpop.trf.xlu0
        %v258 = vpop.trf.xlu0
        %v259 = vpop.trf.xlu0
        %v260 = vpop.trf.xlu0
        %v261 = vpop.trf.xlu0
        %v262 = vpop.trf.xlu0
        %v263 = vpop.trf.xlu0
        %v264 = vpop.trf.xlu0
        %v265 = vpop.trf.xlu0
        %v266 = vpop.trf.xlu0
        %v267 = vpop.trf.xlu0
        %v268 = vpop.trf.xlu0
        %v269 = vpop.trf.xlu0
        %s270 = scalar_lea.vmem [#allocation2], %s24
        %vm271 = vcmask 8192
        %272 = vst.msk [vmem:[%s270] sm:$0x1] %vm271, %v254
        %p273 = scmp.eq.s32.totalorder %s24, 7
        // Predicated region
        $region41: #{tpu_custom_call.1} parent=31 // pred_check
          %p274 = pneg %p273
        $region42: #{tpu_custom_call.1} parent=31 // pred_check_branch
          %276 = sbr.rel (%p274) target = $region44
        $region43: #{tpu_custom_call.1} parent=31 // pred_region
          %v277 = vld [vmem:[#allocation2] sm:$0xff]
          %278 = vxpose.xlu0.b32.start [1/16] %v277, 128
          %279 = vxpose.xlu0.b32.cont [2/16] 0.0, 128
          %280 = vxpose.xlu0.b32.cont [3/16] 0.0, 128
          %281 = vxpose.xlu0.b32.cont [4/16] 0.0, 128
          %282 = vxpose.xlu0.b32.cont [5/16] 0.0, 128
          %283 = vxpose.xlu0.b32.cont [6/16] 0.0, 128
          %284 = vxpose.xlu0.b32.cont [7/16] 0.0, 128
          %285 = vxpose.xlu0.b32.cont [8/16] 0.0, 128
          %286 = vxpose.xlu0.b32.cont [9/16] 0.0, 128
          %287 = vxpose.xlu0.b32.cont [10/16] 0.0, 128
          %288 = vxpose.xlu0.b32.cont [11/16] 0.0, 128
          %289 = vxpose.xlu0.b32.cont [12/16] 0.0, 128
          %290 = vxpose.xlu0.b32.cont [13/16] 0.0, 128
          %291 = vxpose.xlu0.b32.cont [14/16] 0.0, 128
          %292 = vxpose.xlu0.b32.cont [15/16] 0.0, 128
          %293 = vxpose.xlu0.b32.end [16/16] 0.0, 128
          %v294 = vpop.trf.xlu0
          %v295 = vpop.trf.xlu0
          %v296 = vpop.trf.xlu0
          %v297 = vpop.trf.xlu0
          %v298 = vpop.trf.xlu0
          %v299 = vpop.trf.xlu0
          %v300 = vpop.trf.xlu0
          %v301 = vpop.trf.xlu0
          %v302 = vpop.trf.xlu0
          %v303 = vpop.trf.xlu0
          %v304 = vpop.trf.xlu0
          %v305 = vpop.trf.xlu0
          %v306 = vpop.trf.xlu0
          %v307 = vpop.trf.xlu0
          %v308 = vpop.trf.xlu0
          %v309 = vpop.trf.xlu0
          %v310 = vld [vmem:[%s230] sm:$0x3]
          %vm311 = vcmp.eq.s32.totalorder %v310, 0
          %v312 = vsel %vm311, -100000.0, %v294
          %vm313 = vcmask 58368
          %v314 = vsel %vm313, %v312, -inf
          %315 = vmax.xlane.f32.xlu0 %v314
          %v316 = vpop.xlane.xlu0 %315
          %v317 = vsub.f32 %v312, %v316
          %v318 = vmul.f32 %v317, 1.442695
          %v319 = vpow.pop %v318
          %v320 = vsel %vm313, %v319, 0.0
          %321 = vadd.xlane.f32.xlu0 %v320
          %v322 = vpop.xlane.xlu0 %321
          %v323 = vrcp.pop %v322
          %v324 = vmul.f32 %v322, %v323
          %v325 = vsub.f32 2.0, %v324
          %v326 = vmul.f32 %v323, %v325
          %v327 = vmul.f32 %v319, %v326
          %328 = vst.msk [vmem:[#allocation8] sm:$0x3] %vm313, %v327
        $region44: #{tpu_custom_call.1} parent=31 // pred_fallthru
          _
        // Predicated region
        $region45: #{tpu_custom_call.1} parent=31 // pred_check
          %p329 = pneg %p129
        $region46: #{tpu_custom_call.1} parent=31 // pred_check_branch
          %331 = sbr.rel (%p329) target = $region48
        $region47: #{tpu_custom_call.1} parent=31 // pred_region
          %s333 = ssub.s32 32, 32
          %334 = vsyncadd [#allocation5], %s333
          %s335 = smul.addr %s23, 32
          %s336 = scalar_lea.hbm %s3, %s335
          %s338 = sshll.u32 [#allocation8], 4
          %s339 = int_to_ptr.vmem [resolvable:$true] %s338
          %341 = dma.vmem_to_hbm [thread:$0]  %s339, 32, %s336, [#allocation5]
        $region48: #{tpu_custom_call.1} parent=31 // pred_fallthru
          _
        // Predicated region
        $region49: #{tpu_custom_call.1} parent=31 // pred_check
          %p342 = pneg %p129
        $region50: #{tpu_custom_call.1} parent=31 // pred_check_branch
          %344 = sbr.rel (%p342) target = $region52
        $region51: #{tpu_custom_call.1} parent=31 // pred_region
          %345 = dma.done [#allocation5], 32
        $region52: #{tpu_custom_call.1} parent=31 // pred_fallthru
          _
      $region32: #{tpu_custom_call.1} parent=5 // pred_fallthru
        _
      %p346 = scmp.le.s32.totalorder 2, %s14
      // Predicated region
      $region53: #{tpu_custom_call.1} parent=5 // pred_check
        %p347 = pneg %p346
      $region54: #{tpu_custom_call.1} parent=5 // pred_check_branch
        %349 = sbr.rel (%p347) target = $region56
      $region55: #{tpu_custom_call.1} parent=5 // pred_region
        %s350 = ssub.s32 %s14, 2
      $region56: #{tpu_custom_call.1} parent=5 // pred_fallthru
        _
    $region6: #{tpu_custom_call.1} parent=1 // loop_footer
      %s18 = sadd.s32 1, %s14
    $region7: #{tpu_custom_call.1} parent=1 // loop_footer_branch
      %13 = sbr.rel target = $region3
    $region8: #{tpu_custom_call.1} parent=1 // loop_exit
      _
    %351 = vsyncpa [#allocation4], 1
    %s352 = scalar_lea.sflag [#allocation4], 1
    %353 = vsyncpa %s352, 1
    %354 = vsyncpa [#allocation7], 1
    %s355 = scalar_lea.sflag [#allocation7], 1
    %356 = vsyncpa %s355, 1
    %357 = vsyncpa [#allocation5], 1
    %s358 = scalar_lea.sflag [#allocation5], 1
    %359 = vsyncpa %s358, 1

</llo_original>
